<compile_context>
chip_gen: v6e
topology: v6e:2x2x1
jax: 0.10.0
libtpu: 0.0.40
codegen_flags: <defaults>
</compile_context>

<pallas_src>
import functools

import jax
import jax.numpy as jnp
from jax import lax
from jax.experimental import pallas as pl
from jax.experimental.pallas import tpu as pltpu


def _cdiv(a, b):
    return (a + b - 1) // b


def _round_up(a, b):
    return _cdiv(a, b) * b


def _focal_loss_kernel(*refs, gamma, hw_valid, block_lanes, n_alpha,
                       alpha_mode, j_split, has_edge):
    if alpha_mode == "none":
        logits_ref, target_ref, out_ref, acc_ref = refs
        alpha_ref = None
    else:
        logits_ref, target_ref, alpha_ref, out_ref, acc_ref = refs

    p = pl.program_id(0)
    j2 = pl.program_id(2)
    jj = p * j_split + j2                       # spatial block index (unclamped)

    @pl.when(j2 == 0)
    def _():
        acc_ref[...] = jnp.zeros_like(acc_ref)

    x = logits_ref[0].astype(jnp.float32)       # (C, tq): classes on sublanes
    t = target_ref[0].astype(jnp.int32)         # (1, tq): widened from int8

    # log-softmax pieces along the class (sublane) axis.
    m = jnp.max(x, axis=0, keepdims=True)       # (1, tq)
    z = x - m                                   # (C, tq), <= 0
    lse = jnp.log(jnp.sum(jnp.exp(z), axis=0, keepdims=True))   # (1, tq)

    # target-class gather: select on z + sublane reduce (no one-hot multiply).
    cls = lax.broadcasted_iota(jnp.int32, x.shape, 0)
    sel = cls == t                              # (C, tq), one hit per valid col
    z_t = jnp.sum(jnp.where(sel, z, 0.0), axis=0, keepdims=True)
    logpt = z_t - lse                           # (1, tq), <= 0

    if alpha_mode == "smem":
        # Short select chain on SMEM scalars.  Out-of-range targets fall back
        # to alpha[0] (invalid input anyway).
        at = jnp.full(t.shape, alpha_ref[0], jnp.float32)
        for c in range(1, n_alpha):
            at = jnp.where(t == c, alpha_ref[c], at)
        logpt_w = logpt * at
    elif alpha_mode == "vmem":
        # Many classes: reuse the one-hot compare with a resident (C, 1) alpha
        # column -> constant-depth instead of a serial n_alpha-long chain.
        at = jnp.sum(jnp.where(sel, alpha_ref[...], 0.0), axis=0, keepdims=True)
        logpt_w = logpt * at
    else:
        logpt_w = logpt

    g = float(gamma)
    if g == 0.0:
        loss = -logpt_w                          # skip pt/focal entirely
    else:
        pt = jnp.exp(logpt)
        om_pt = jnp.maximum(1.0 - pt, 0.0)       # guard pt ~ 1 rounding
        if g == int(g) and g >= 1.0:
            focal = om_pt
            for _ in range(int(g) - 1):          # gamma=2 -> one VPU multiply
                focal = focal * om_pt
        else:
            focal = om_pt ** g                   # general non-integer gamma
        loss = -focal * logpt_w                  # (1, tq)

    if has_edge:
        # Only blocks overlapping (or fully past) the ragged tail pay for the
        # column mask; interior blocks accumulate unmasked.
        is_edge = (jj + 1) * block_lanes > hw_valid

        @pl.when(jnp.logical_not(is_edge))
        def _():
            acc_ref[...] += loss

        @pl.when(is_edge)
        def _():
            col = jj * block_lanes + lax.broadcasted_iota(
                jnp.int32, loss.shape, 1)
            acc_ref[...] += jnp.where(col < hw_valid, loss, 0.0)
    else:
        acc_ref[...] += loss

    @pl.when(j2 == pl.num_programs(2) - 1)
    def _():
        # single cross-lane reduce per (split, batch) pair, epilogue only.
        out_ref[...] = jnp.sum(acc_ref[...]).reshape(1, 1, 1, 1)


def focal_loss_pallas(logits_nchw, target_nhw, *, gamma=0.0, alpha=None,
                      size_average=True, block_lanes=None):
    """Matches FocalLoss.forward for 4-D NCHW logits and integer targets."""
    N, C, H, W = logits_nchw.shape
    HW = H * W

    # (N, C, H, W) -> (N, C, H*W): free reshape.  Classes -> sublanes,
    # spatial -> lanes.  No transpose, no jnp.pad copy of the logits.
    x = logits_nchw.reshape(N, C, HW)

    # Targets are streamed once per position: narrow them to cut HBM traffic.
    tgt_dtype = jnp.int8 if C <= 127 else jnp.int32
    tgt = target_nhw.reshape(N, 1, HW).astype(tgt_dtype)

    in_itemsize = jnp.dtype(x.dtype).itemsize
    tgt_itemsize = jnp.dtype(tgt_dtype).itemsize

    # Generation-aware VMEM budget (v7x: 64 MiB/TC vs 128 MiB on v5e/v6e).
    try:
        vmem_cap = int(getattr(pltpu.get_tpu_info(), "vmem_capacity_bytes",
                               64 * 2 ** 20))
    except Exception:
        vmem_cap = 64 * 2 ** 20
    if vmem_cap <= 0:
        vmem_cap = 64 * 2 ** 20
    budget = min(vmem_cap // 3, 24 * 2 ** 20)

    if block_lanes is None:
        # VMEM bytes per lane column: double-buffered logits + target blocks
        # at their HBM dtype, ~6 live (C, tq) f32 temporaries, (1, tq) f32 acc.
        per_lane = C * (2 * in_itemsize + 6 * 4) + 2 * tgt_itemsize + 8
        cap = (budget // per_lane) // 128 * 128
    else:
        cap = block_lanes // 128 * 128
    cap = max(128, min(cap, 131072))

    # Re-balance the lane tile against HW so boundary waste stays < 128 cols.
    nb = _cdiv(_round_up(HW, 128), cap)
    tq = _round_up(_cdiv(HW, nb), 128)

    num_j = _cdiv(HW, tq)           # Pallas boundary block covers ragged tail

    # v7x has 2 TensorCores: when the batch axis alone can't occupy both,
    # split the spatial blocks across an extra leading "parallel" axis.
    p_split = 2 if (N == 1 and num_j >= 2) else 1
    j_split = _cdiv(num_j, p_split)
    has_edge = (HW % tq != 0) or (p_split * j_split != num_j)
    last_blk = num_j - 1

    # Mirror the PyTorch __init__ handling of alpha.
    if alpha is None:
        alpha_arr = None
    elif isinstance(alpha, (float, int)) and not isinstance(alpha, bool):
        alpha_arr = jnp.asarray([alpha, 1.0 - alpha], jnp.float32)
    else:
        alpha_arr = jnp.asarray(alpha, jnp.float32).reshape(-1)
    n_alpha = 0 if alpha_arr is None else int(alpha_arr.shape[0])

    a_col = None
    if n_alpha == 0:
        alpha_mode = "none"
    elif n_alpha < 8:
        alpha_mode = "smem"
    else:
        alpha_mode = "vmem"
        if n_alpha >= C:
            a_col = alpha_arr[:C]
        else:   # degenerate spec: pad with the last entry
            a_col = jnp.concatenate(
                [alpha_arr,
                 jnp.full((C - n_alpha,), alpha_arr[-1], jnp.float32)])
        a_col = a_col.reshape(C, 1)

    def block_imap(p, n, j2):
        # Clamp so a dead block (only possible when p_split splits an odd
        # number of spatial blocks) re-reads the last valid block; its columns
        # are fully masked in-kernel.
        jj = jnp.minimum(p * j_split + j2, last_blk)
        return (n, 0, jj)

    in_specs = [
        pl.BlockSpec((1, C, tq), block_imap),   # logits block
        pl.BlockSpec((1, 1, tq), block_imap),   # target block
    ]
    args = [x, tgt]
    if alpha_mode == "smem":
        in_specs.append(pl.BlockSpec(memory_space=pltpu.MemorySpace.SMEM))
        args.append(alpha_arr)
    elif alpha_mode == "vmem":
        # Constant block index -> fetched once, stays resident in VMEM.
        in_specs.append(pl.BlockSpec((C, 1), lambda p, n, j2: (0, 0)))
        args.append(a_col)

    kernel = functools.partial(
        _focal_loss_kernel, gamma=float(gamma), hw_valid=HW, block_lanes=tq,
        n_alpha=n_alpha, alpha_mode=alpha_mode, j_split=j_split,
        has_edge=has_edge)

    partials = pl.pallas_call(
        kernel,
        out_shape=jax.ShapeDtypeStruct((p_split, N, 1, 1), jnp.float32),
        grid_spec=pltpu.PrefetchScalarGridSpec(
            num_scalar_prefetch=0,
            grid=(p_split, N, j_split),
            in_specs=in_specs,
            out_specs=pl.BlockSpec((1, 1, 1, 1),
                                   lambda p, n, j2: (p, n, 0, 0)),
            scratch_shapes=[pltpu.VMEM((1, tq), jnp.float32)],
        ),
        compiler_params=pltpu.CompilerParams(
            dimension_semantics=("parallel", "parallel", "arbitrary"),
            vmem_limit_bytes=int(min(vmem_cap * 3 // 4, 96 * 2 ** 20))),
    )(*args)

    total = jnp.sum(partials)       # combine per-(split, batch) partials
    if size_average:
        return total / jnp.float32(N * HW)
    return total


def _focal_loss_ref(logits_nchw, target_nhw, *, gamma, alpha, size_average):
    N, C, H, W = logits_nchw.shape
    x = jnp.transpose(logits_nchw.reshape(N, C, H * W), (0, 2, 1)).reshape(-1, C)
    x = x.astype(jnp.float32)
    t = target_nhw.reshape(-1).astype(jnp.int32)
    logp = jax.nn.log_softmax(x, axis=-1)
    logpt = jnp.take_along_axis(logp, t[:, None], axis=1)[:, 0]
    pt = jnp.exp(logpt)
    if alpha is not None:
        if isinstance(alpha, (float, int)) and not isinstance(alpha, bool):
            a = jnp.asarray([alpha, 1.0 - alpha], jnp.float32)
        else:
            a = jnp.asarray(alpha, jnp.float32).reshape(-1)
        logpt = logpt * a[t]
    loss = -1.0 * (1.0 - pt) ** float(gamma) * logpt
    return loss.mean() if size_average else loss.sum()


if __name__ == "__main__":
    key = jax.random.PRNGKey(0)

    configs = [
        # (N, C, H, W, gamma, alpha, size_average, dtype, block_lanes, tol)
        (2, 4, 16, 16, 2.0, [0.1, 0.2, 0.3, 0.4], True, jnp.float32, None, 1e-5),
        (2, 3, 10, 10, 0.0, None, False, jnp.float32, None, 1e-5),   # ragged HW, gamma=0
        (2, 2, 8, 8, 1, 0.25, True, jnp.float32, None, 1e-5),        # float alpha -> [a, 1-a]
        (1, 4, 16, 17, 2.0, None, True, jnp.float32, 128, 1e-5),     # N=1 -> 2-way spatial split
        (2, 9, 8, 8, 2.0, [0.02 + 0.05 * i for i in range(9)], True,
         jnp.float32, None, 1e-5),                                   # many-class alpha (VMEM column)
        (2, 4, 16, 16, 2.0, [0.1, 0.2, 0.3, 0.4], True, jnp.bfloat16, None, 2e-3),
    ]

    for idx, (N, C, H, W, gamma, alpha, size_average, dtype, bl, tol) in \
            enumerate(configs):
        k1, k2 = jax.random.split(jax.random.fold_in(key, idx))
        logits = jax.random.normal(k1, (N, C, H, W), jnp.float32).astype(dtype)
        target = jax.random.randint(k2, (N, H, W), 0, C, jnp.int32)

        out = focal_loss_pallas(logits, target, gamma=gamma, alpha=alpha,
                                size_average=size_average, block_lanes=bl)
        out = jax.block_until_ready(out)
        ref = _focal_loss_ref(logits, target, gamma=gamma, alpha=alpha,
                              size_average=size_average)
        assert jnp.allclose(out, ref, rtol=tol, atol=tol), \
            (idx, float(out), float(ref))

    print("KERNEL_OK")
</pallas_src>

<mosaic_0001>
module attributes {stable_mosaic.version = 11 : i64} {
  func.func @_focal_loss_kernel(%arg0: i32, %arg1: i32, %arg2: i32, %arg3: memref<1x4x256xf32, #tpu.memory_space<vmem>>, %arg4: memref<1x1x256xi8, #tpu.memory_space<vmem>>, %arg5: memref<4xf32, #tpu.memory_space<smem>>, %arg6: memref<1x1x1x1xf32, #tpu.memory_space<vmem>>, %arg7: memref<1x256xf32, #tpu.memory_space<vmem>>) attributes {dimension_semantics = [#tpu.dimension_semantics<parallel>, #tpu.dimension_semantics<parallel>, #tpu.dimension_semantics<arbitrary>], iteration_bounds = array<i64: 1, 2, 1>, scalar_prefetch = 0 : i64, scratch_operands = 1 : i64, tpu.core_type = #tpu.core_type<tc>, window_params = [{transform_indices = @transform_0, window_bounds = array<i64: 1, 4, 256>}, {transform_indices = @transform_1, window_bounds = array<i64: 1, 1, 256>}, {transform_indices = @transform_2, window_bounds = array<i64: 4>}, {transform_indices = @transform_3, window_bounds = array<i64: 1, 1, 1, 1>}]} {
    %c0_i32 = arith.constant 0 : i32
    %0 = arith.cmpi eq, %arg2, %c0_i32 : i32
    %1 = arith.extui %0 : i1 to i32
    %c0_i32_0 = arith.constant 0 : i32
    %2 = arith.cmpi ne, %1, %c0_i32_0 : i32
    scf.if %2 {
      %cst_19 = arith.constant 0.000000e+00 : f32
      %57 = vector.broadcast %cst_19 : f32 to vector<1x256xf32>
      %c0_20 = arith.constant 0 : index
      %c0_21 = arith.constant 0 : index
      %58 = vector.load %arg7[%c0_20, %c0_21] : memref<1x256xf32, #tpu.memory_space<vmem>>, vector<1x256xf32>
      tpu.vector_store %arg7[%c0_20, %c0_21], %57 {strides = array<i32>} : memref<1x256xf32, #tpu.memory_space<vmem>>, vector<1x256xf32>,
    } else {
    }
    %c0 = arith.constant 0 : index
    %c0_1 = arith.constant 0 : index
    %c0_2 = arith.constant 0 : index
    %3 = vector.load %arg3[%c0, %c0_1, %c0_2] : memref<1x4x256xf32, #tpu.memory_space<vmem>>, vector<1x4x256xf32>
    %4 = vector.shape_cast %3 : vector<1x4x256xf32> to vector<4x256xf32>
    %c0_3 = arith.constant 0 : index
    %c0_4 = arith.constant 0 : index
    %c0_5 = arith.constant 0 : index
    %5 = vector.load %arg4[%c0_3, %c0_4, %c0_5] : memref<1x1x256xi8, #tpu.memory_space<vmem>>, vector<1x1x256xi8>
    %6 = vector.shape_cast %5 : vector<1x1x256xi8> to vector<1x256xi8>
    %7 = arith.extsi %6 : vector<1x256xi8> to vector<1x256xi32>
    %cst = arith.constant dense<0xFF800000> : vector<256xf32>
    %8 = vector.multi_reduction <maximumf>, %4, %cst [0] : vector<4x256xf32> to vector<256xf32>
    %9 = vector.shape_cast %8 : vector<256xf32> to vector<1x256xf32>
    %10 = vector.broadcast %9 : vector<1x256xf32> to vector<4x256xf32>
    %11 = arith.subf %4, %10 : vector<4x256xf32>
    %12 = math.exp %11 : vector<4x256xf32>
    %cst_6 = arith.constant dense<0.000000e+00> : vector<256xf32>
    %13 = vector.multi_reduction <add>, %12, %cst_6 [0] : vector<4x256xf32> to vector<256xf32>
    %14 = vector.shape_cast %13 : vector<256xf32> to vector<1x256xf32>
    %15 = math.log %14 : vector<1x256xf32>
    %16 = tpu.iota {dimensions = array<i32: 0>} : vector<4x256xi32>
    %17 = vector.broadcast %7 : vector<1x256xi32> to vector<4x256xi32>
    %18 = arith.cmpi eq, %16, %17 : vector<4x256xi32>
    %cst_7 = arith.constant 0.000000e+00 : f32
    %19 = vector.broadcast %cst_7 : f32 to vector<4x256xf32>
    %20 = arith.select %18, %11, %19 : vector<4x256xi1>, vector<4x256xf32>
    %cst_8 = arith.constant dense<0.000000e+00> : vector<256xf32>
    %21 = vector.multi_reduction <add>, %20, %cst_8 [0] : vector<4x256xf32> to vector<256xf32>
    %22 = vector.shape_cast %21 : vector<256xf32> to vector<1x256xf32>
    %23 = arith.subf %22, %15 : vector<1x256xf32>
    %c0_9 = arith.constant 0 : index
    %24 = memref.load %arg5[%c0_9] : memref<4xf32, #tpu.memory_space<smem>>
    %25 = vector.broadcast %24 : f32 to vector<1x256xf32>
    %c1_i32 = arith.constant 1 : i32
    %26 = vector.broadcast %c1_i32 : i32 to vector<1x256xi32>
    %27 = arith.cmpi eq, %7, %26 : vector<1x256xi32>
    %c1 = arith.constant 1 : index
    %28 = memref.load %arg5[%c1] : memref<4xf32, #tpu.memory_space<smem>>
    %29 = vector.broadcast %28 : f32 to vector<1x256xf32>
    %30 = arith.select %27, %29, %25 : vector<1x256xi1>, vector<1x256xf32>
    %c2_i32 = arith.constant 2 : i32
    %31 = vector.broadcast %c2_i32 : i32 to vector<1x256xi32>
    %32 = arith.cmpi eq, %7, %31 : vector<1x256xi32>
    %c2 = arith.constant 2 : index
    %33 = memref.load %arg5[%c2] : memref<4xf32, #tpu.memory_space<smem>>
    %34 = vector.broadcast %33 : f32 to vector<1x256xf32>
    %35 = arith.select %32, %34, %30 : vector<1x256xi1>, vector<1x256xf32>
    %c3_i32 = arith.constant 3 : i32
    %36 = vector.broadcast %c3_i32 : i32 to vector<1x256xi32>
    %37 = arith.cmpi eq, %7, %36 : vector<1x256xi32>
    %c3 = arith.constant 3 : index
    %38 = memref.load %arg5[%c3] : memref<4xf32, #tpu.memory_space<smem>>
    %39 = vector.broadcast %38 : f32 to vector<1x256xf32>
    %40 = arith.select %37, %39, %35 : vector<1x256xi1>, vector<1x256xf32>
    %41 = arith.mulf %23, %40 : vector<1x256xf32>
    %42 = math.exp %23 : vector<1x256xf32>
    %cst_10 = arith.constant 1.000000e+00 : f32
    %43 = vector.broadcast %cst_10 : f32 to vector<1x256xf32>
    %44 = arith.subf %43, %42 : vector<1x256xf32>
    %cst_11 = arith.constant 0.000000e+00 : f32
    %45 = vector.broadcast %cst_11 : f32 to vector<1x256xf32>
    %46 = arith.maximumf %44, %45 : vector<1x256xf32>
    %47 = arith.mulf %46, %46 : vector<1x256xf32>
    %cst_12 = arith.constant 0.000000e+00 : f32
    %48 = vector.broadcast %cst_12 : f32 to vector<1x256xf32>
    %49 = arith.subf %48, %47 : vector<1x256xf32>
    %50 = arith.mulf %49, %41 : vector<1x256xf32>
    %c0_13 = arith.constant 0 : index
    %c0_14 = arith.constant 0 : index
    %51 = vector.load %arg7[%c0_13, %c0_14] : memref<1x256xf32, #tpu.memory_space<vmem>>, vector<1x256xf32>
    %52 = arith.addf %51, %50 : vector<1x256xf32>
    %c0_15 = arith.constant 0 : index
    %c0_16 = arith.constant 0 : index
    %53 = vector.load %arg7[%c0_15, %c0_16] : memref<1x256xf32, #tpu.memory_space<vmem>>, vector<1x256xf32>
    tpu.vector_store %arg7[%c0_15, %c0_16], %52 {strides = array<i32>} : memref<1x256xf32, #tpu.memory_space<vmem>>, vector<1x256xf32>,
    %c0_i32_17 = arith.constant 0 : i32
    %54 = arith.cmpi eq, %arg2, %c0_i32_17 : i32
    %55 = arith.extui %54 : i1 to i32
    %c0_i32_18 = arith.constant 0 : i32
    %56 = arith.cmpi ne, %55, %c0_i32_18 : i32
    scf.if %56 {
      %c0_19 = arith.constant 0 : index
      %c0_20 = arith.constant 0 : index
      %57 = vector.load %arg7[%c0_19, %c0_20] : memref<1x256xf32, #tpu.memory_space<vmem>>, vector<1x256xf32>
      %58 = vector.shape_cast %57 : vector<1x256xf32> to vector<1x1x256xf32>
      %cst_21 = arith.constant dense<0.000000e+00> : vector<1xf32>
      %59 = vector.multi_reduction <add>, %58, %cst_21 [1, 2] : vector<1x1x256xf32> to vector<1xf32>
      %60 = vector.shape_cast %59 : vector<1xf32> to vector<1x1x1xf32>
      %61 = vector.extract %60[0, 0, 0] : f32 from vector<1x1x1xf32>
      %62 = vector.broadcast %61 : f32 to vector<1x1x1x1xf32>
      %c0_22 = arith.constant 0 : index
      %c0_23 = arith.constant 0 : index
      %c0_24 = arith.constant 0 : index
      %c0_25 = arith.constant 0 : index
      %63 = vector.load %arg6[%c0_22, %c0_23, %c0_24, %c0_25] : memref<1x1x1x1xf32, #tpu.memory_space<vmem>>, vector<1x1x1x1xf32>
      tpu.vector_store %arg6[%c0_22, %c0_23, %c0_24, %c0_25], %62 {strides = array<i32>} : memref<1x1x1x1xf32, #tpu.memory_space<vmem>>, vector<1x1x1x1xf32>,
    } else {
    }
    return
  }
  func.func @transform_0(%arg0: i32, %arg1: i32, %arg2: i32) -> (i32, i32, i32) {
    %c1_i32 = arith.constant 1 : i32
    %0 = arith.muli %arg0, %c1_i32 : i32
    %1 = arith.addi %0, %arg2 : i32
    %c0_i32 = arith.constant 0 : i32
    %2 = arith.minsi %1, %c0_i32 : i32
    %c0_i32_0 = arith.constant 0 : i32
    %c0_i32_1 = arith.constant 0 : i32
    return %arg1, %c0_i32_0, %2 : i32, i32, i32
  }
  func.func @transform_1(%arg0: i32, %arg1: i32, %arg2: i32) -> (i32, i32, i32) {
    %c1_i32 = arith.constant 1 : i32
    %0 = arith.muli %arg0, %c1_i32 : i32
    %1 = arith.addi %0, %arg2 : i32
    %c0_i32 = arith.constant 0 : i32
    %2 = arith.minsi %1, %c0_i32 : i32
    %c0_i32_0 = arith.constant 0 : i32
    %c0_i32_1 = arith.constant 0 : i32
    return %arg1, %c0_i32_0, %2 : i32, i32, i32
  }
  func.func @transform_2(%arg0: i32, %arg1: i32, %arg2: i32) -> i32 {
    %c0_i32 = arith.constant 0 : i32
    %c0_i32_0 = arith.constant 0 : i32
    return %c0_i32 : i32
  }
  func.func @transform_3(%arg0: i32, %arg1: i32, %arg2: i32) -> (i32, i32, i32, i32) {
    %c0_i32 = arith.constant 0 : i32
    %c0_i32_0 = arith.constant 0 : i32
    %c0_i32_1 = arith.constant 0 : i32
    return %arg0, %arg1, %c0_i32, %c0_i32_0 : i32, i32, i32, i32
  }
}

</mosaic_0001>

<llo_original>
// kernel: tpu_custom_call.1
$region0: #{tpu_custom_call.1}
  #allocation0 [shape = 'u32[]', space=smem, size = 0x4, offset = 0x4, fixed_abs, tag = 'smem constant byte address 0x4 - core index']
  #allocation1 [shape = 'u32[144,128]{1,0:T(1,128)}', space=vmem, size = 0x12000, scoped, tag = 'internal scratch']
  #allocation2 [shape = 'f32[1,256]{1,0:T(1,128)}', space=vmem, size = 0x400, scoped, tag = 'scratch operand']
  %s0 = inlined_call_operand.hbm [shape: f32[2,4,256], index: 0, kind: input, shape index: {}]
  %s1 = inlined_call_operand.vmem [shape: s8[2,1,256], index: 1, kind: input, shape index: {}]
  %s2 = inlined_call_operand.vmem [shape: f32[4], index: 2, kind: input, shape index: {}]
  %s3 = inlined_call_operand.vmem [shape: f32[1,2,1,1], index: 3, kind: output, shape index: {}]
  %s4 = sld [smem:[#allocation0]]
  $region61: #{tpu_custom_call.1} parent=0
    _
  %s6 = ssub.s32 1, %s4
  %s7 = scalar_select 0, %s6, %s4
  $region1: #{tpu_custom_call.1} parent=0
    #allocation3 [shape = 'u8[8192]{0}', space=vmem, size = 0x2000, scoped, tag = 'input window, operand 0']
    #allocation4 [shape = 's32[2]{0}', space=sflag, size = 0x8, scoped, tag = 'scoped memory for tpu_custom_call.1']
    #allocation5 [shape = 's32[2]{0}', space=sflag, size = 0x8, scoped, tag = 'scoped memory for tpu_custom_call.1']
    #allocation6 [shape = 'u8[512]{0}', space=smem, size = 0x200, scoped, tag = 'input window, operand 2, single buffered']
    %8 = vsyncpa [#allocation4], 0
    %s9 = scalar_lea.sflag [#allocation4], 1
    %10 = vsyncpa %s9, 0
    %11 = vsyncpa [#allocation5], 0
    loop: start=0, step=1, limit=4
    $region2: #{tpu_custom_call.1} parent=1 // loop_pre_header
      _
    $region3: #{tpu_custom_call.1} parent=1 // loop_header
      %s13 = sphi 0, %s17
      %p14 = scmp.ge.s32.totalorder %s13, 4
      %s20 = sphi 0, %s39
      %s21 = sphi 0, %s35
      %s22 = sphi 0, %s31
      %s23 = sphi 0, %s20
      %s24 = sphi 0, %s21
      %s25 = sphi 0, %s22
      %s26 = sphi 0, %s23
      %s27 = sphi 0, %s24
      %s28 = sphi 0, %s25
      %s50 = sphi 0, %s52
      %s53 = sphi 0, %s50
      %s54 = sphi 0, %s53
      %s70 = sphi 0, %s54
      %s84 = sphi 0, %s86
      %s87 = sphi 0, %s84
      %s88 = sphi 0, %s87
      %s104 = sphi 0, %s88
      %s108 = sphi 0, %s108
      %s110 = sphi 0, %s108
      %s111 = sphi 0, %s110
      %s125 = sphi 0, %s111
      %s133 = sphi 0, %s135
      %s136 = sphi 0, %s133
      %s137 = sphi 0, %s136
      %s153 = sphi 0, %s137
    $region4: #{tpu_custom_call.1} parent=1 // loop_header_branch
      %16 = sbr.rel (%p14) target = $region8
    $region5: #{tpu_custom_call.1} parent=1 // loop_body
      %s18 = ssub.s32 %s13, 1
      %s19 = ssub.s32 %s13, 2
      %s29 = sadd.s32 1, %s22
      %p30 = scmp.ge.s32.totalorder %s29, 1
      %s31 = scalar_select %p30, 0, %s29
      %s32 = sadd.s32 1, %s21
      %s33 = scalar_select %p30, %s32, %s21
      %p34 = scmp.ge.s32.totalorder %s33, 2
      %s35 = scalar_select %p34, 0, %s33
      %s36 = sadd.s32 1, %s20
      %s37 = scalar_select %p34, %s36, %s20
      %p38 = scmp.ge.s32.totalorder %s37, 1
      %s39 = scalar_select %p38, 0, %s37
      %s40 = sadd.s32 %s20, %s22
      %p41 = scmp.lt.s32.totalorder %s40, 0
      %s42 = scalar_select %p41, %s40, 0
      %s43 = sadd.s32 %s39, %s31
      %p44 = scmp.lt.s32.totalorder %s43, 0
      %s45 = scalar_select %p44, %s43, 0
      %s46 = ssub.s32 %s21, %s35
      %s47 = ssub.s32 %s42, %s45
      %s48 = sor.u32 %s46, %s47
      %p49 = scmp.eq.s32.totalorder %s48, 0
      %s51 = sadd.s32 %s50, 1
      %s52 = scalar_select %p49, %s50, %s51
      %p55 = pneg %p49
      %p56 = scmp.eq.s32.totalorder %s13, 1
      %p57 = por %p55, %p56
      %p58 = scmp.ne.s32.totalorder %s50, %s53
      %p59 = scmp.eq.s32.totalorder %s13, 0
      %p60 = por %p58, %p59
      %p61 = scmp.ne.s32.totalorder %s50, %s53
      %p62 = scmp.eq.s32.totalorder %s18, 1
      %p63 = por %p61, %p62
      %p64 = scmp.ne.s32.totalorder %s53, %s54
      %p65 = scmp.eq.s32.totalorder %s18, 0
      %p66 = por %p64, %p65
      %p67 = scmp.ne.s32.totalorder %s53, %s54
      %p68 = scmp.eq.s32.totalorder %s19, 1
      %p69 = por %p67, %p68
      %p71 = scmp.ne.s32.totalorder %s54, %s70
      %p72 = scmp.eq.s32.totalorder %s19, 0
      %p73 = por %p71, %p72
      %s74 = sadd.s32 %s20, %s22
      %p75 = scmp.lt.s32.totalorder %s74, 0
      %s76 = scalar_select %p75, %s74, 0
      %s77 = sadd.s32 %s39, %s31
      %p78 = scmp.lt.s32.totalorder %s77, 0
      %s79 = scalar_select %p78, %s77, 0
      %s80 = ssub.s32 %s21, %s35
      %s81 = ssub.s32 %s76, %s79
      %s82 = sor.u32 %s80, %s81
      %p83 = scmp.eq.s32.totalorder %s82, 0
      %s85 = sadd.s32 %s84, 1
      %s86 = scalar_select %p83, %s84, %s85
      %p89 = pneg %p83
      %p90 = scmp.eq.s32.totalorder %s13, 1
      %p91 = por %p89, %p90
      %p92 = scmp.ne.s32.totalorder %s84, %s87
      %p93 = scmp.eq.s32.totalorder %s13, 0
      %p94 = por %p92, %p93
      %p95 = scmp.ne.s32.totalorder %s84, %s87
      %p96 = scmp.eq.s32.totalorder %s18, 1
      %p97 = por %p95, %p96
      %p98 = scmp.ne.s32.totalorder %s87, %s88
      %p99 = scmp.eq.s32.totalorder %s18, 0
      %p100 = por %p98, %p99
      %p101 = scmp.ne.s32.totalorder %s87, %s88
      %p102 = scmp.eq.s32.totalorder %s19, 1
      %p103 = por %p101, %p102
      %p105 = scmp.ne.s32.totalorder %s88, %s104
      %p106 = scmp.eq.s32.totalorder %s19, 0
      %p107 = por %p105, %p106
      %s109 = sadd.s32 %s108, 1
      %p112 = scmp.eq.s32.totalorder %s13, 1
      %p113 = scmp.ne.s32.totalorder %s108, %s110
      %p114 = scmp.eq.s32.totalorder %s13, 0
      %p115 = por %p113, %p114
      %p116 = scmp.ne.s32.totalorder %s108, %s110
      %p117 = scmp.eq.s32.totalorder %s18, 1
      %p118 = por %p116, %p117
      %p119 = scmp.ne.s32.totalorder %s110, %s111
      %p120 = scmp.eq.s32.totalorder %s18, 0
      %p121 = por %p119, %p120
      %p122 = scmp.ne.s32.totalorder %s110, %s111
      %p123 = scmp.eq.s32.totalorder %s19, 1
      %p124 = por %p122, %p123
      %p126 = scmp.ne.s32.totalorder %s111, %s125
      %p127 = scmp.eq.s32.totalorder %s19, 0
      %p128 = por %p126, %p127
      %s129 = ssub.s32 %s20, %s39
      %s130 = ssub.s32 %s21, %s35
      %s131 = sor.u32 %s129, %s130
      %p132 = scmp.eq.s32.totalorder %s131, 0
      %s134 = sadd.s32 %s133, 1
      %s135 = scalar_select %p132, %s133, %s134
      %p138 = pneg %p132
      %p139 = scmp.eq.s32.totalorder %s13, 1
      %p140 = por %p138, %p139
      %p141 = scmp.ne.s32.totalorder %s133, %s136
      %p142 = scmp.eq.s32.totalorder %s13, 0
      %p143 = por %p141, %p142
      %p144 = scmp.ne.s32.totalorder %s133, %s136
      %p145 = scmp.eq.s32.totalorder %s18, 1
      %p146 = por %p144, %p145
      %p147 = scmp.ne.s32.totalorder %s136, %s137
      %p148 = scmp.eq.s32.totalorder %s18, 0
      %p149 = por %p147, %p148
      %p150 = scmp.ne.s32.totalorder %s136, %s137
      %p151 = scmp.eq.s32.totalorder %s19, 1
      %p152 = por %p150, %p151
      %p154 = scmp.ne.s32.totalorder %s137, %s153
      %p155 = scmp.eq.s32.totalorder %s19, 0
      %p156 = por %p154, %p155
      %p157 = scmp.le.s32.totalorder 1, %s13
      %p158 = scmp.lt.s32.totalorder %s13, 3
      %p159 = pnand %p157, %p158
      %p160 = pneg %p159
      // Predicated region
      $region9: #{tpu_custom_call.1} parent=5 // pred_check
        _
      $region10: #{tpu_custom_call.1} parent=5 // pred_check_branch
        %162 = sbr.rel (%p159) target = $region12
      $region11: #{tpu_custom_call.1} parent=5 // pred_region
        %s163 = ssub.s32 %s13, 1
        // Predicated region
        $region13: #{tpu_custom_call.1} parent=11 // pred_check
          %p164 = pneg %p121
        $region14: #{tpu_custom_call.1} parent=11 // pred_check_branch
          %166 = sbr.rel (%p164) target = $region16
        $region15: #{tpu_custom_call.1} parent=11 // pred_region
          %s168 = ssub.s32 16, 16
          %169 = vsyncadd [#allocation5], %s168
          %s171 = sshll.u32 %s2, 4
          %s172 = int_to_ptr.vmem [resolvable:$true] %s171
          %174 = dma.vmem_to_smem %s172, 16, [#allocation6], [#allocation5]
        $region16: #{tpu_custom_call.1} parent=11 // pred_fallthru
          _
      $region12: #{tpu_custom_call.1} parent=5 // pred_fallthru
        _
      %p175 = scmp.lt.s32.totalorder %s13, 2
      // Predicated region
      $region17: #{tpu_custom_call.1} parent=5 // pred_check
        %p176 = pneg %p175
      $region18: #{tpu_custom_call.1} parent=5 // pred_check_branch
        %178 = sbr.rel (%p176) target = $region20
      $region19: #{tpu_custom_call.1} parent=5 // pred_region
        // Predicated region
        $region21: #{tpu_custom_call.1} parent=19 // pred_check
          %p179 = pneg %p60
        $region22: #{tpu_custom_call.1} parent=19 // pred_check_branch
          %181 = sbr.rel (%p179) target = $region24
        $region23: #{tpu_custom_call.1} parent=19 // pred_region
          %s182 = sand.u32 %s50, 1
          %s183 = scalar_lea.sflag [#allocation4], %s182
          %s184 = sand.u32 %s50, 1
          %s185 = smul.addr %s184, 8
          %s186 = scalar_lea.vmem [#allocation3], %s185
          %s187 = sadd.s32 %s20, %s22
          %p188 = scmp.lt.s32.totalorder %s187, 0
          %s189 = scalar_select %p188, %s187, 0
          %s190 = smul.u32 2, %s189
          %s192 = ssub.s32 128, 128
          %193 = vsyncadd %s183, %s192
          %s194 = smul.addr %s21, 2
          %s195 = sadd.s32 %s190, %s194
          %s196 = smul.addr %s195, 64
          %s197 = scalar_lea.hbm %s0, %s196
          %s199 = sshll.u32 %s186, 4
          %s200 = int_to_ptr.vmem [resolvable:$true] %s199
          %202 = dma.hbm_to_vmem [thread:$0]  %s197, 128, %s200, %s183
        $region24: #{tpu_custom_call.1} parent=19 // pred_fallthru
          _
        // Predicated region
        $region25: #{tpu_custom_call.1} parent=19 // pred_check
          %p203 = pneg %p94
        $region26: #{tpu_custom_call.1} parent=19 // pred_check_branch
          %205 = sbr.rel (%p203) target = $region28
        $region27: #{tpu_custom_call.1} parent=19 // pred_region
          %s206 = sadd.s32 %s20, %s22
          %p207 = scmp.lt.s32.totalorder %s206, 0
          %s208 = scalar_select %p207, %s206, 0
          %s209 = smul.u32 2, %s208
          %p210 = scmp.lt.s32.totalorder %s21, 1
          %s211 = scalar_select %p210, %s21, 1
          %p212 = scmp.lt.s32.totalorder %s209, 1
          %s213 = scalar_select %p212, %s209, 1
          %s214 = smul.addr %s211, 2
          %s215 = sadd.s32 %s213, %s214
          %s216 = scalar_lea.vmem %s1, %s215
          %s217 = sadd.s32 %s20, %s22
          %p218 = scmp.lt.s32.totalorder %s217, 0
          %s219 = scalar_select %p218, %s217, 0
          %s220 = smul.u32 2, %s219
        $region28: #{tpu_custom_call.1} parent=19 // pred_fallthru
          _
      $region20: #{tpu_custom_call.1} parent=5 // pred_fallthru
        _
      %p221 = scmp.le.s32.totalorder 1, %s13
      %p222 = scmp.lt.s32.totalorder %s13, 3
      %p223 = pnand %p221, %p222
      %p224 = pneg %p223
      // Predicated region
      $region29: #{tpu_custom_call.1} parent=5 // pred_check
        _
      $region30: #{tpu_custom_call.1} parent=5 // pred_check_branch
        %226 = sbr.rel (%p223) target = $region32
      $region31: #{tpu_custom_call.1} parent=5 // pred_region
        %s227 = ssub.s32 %s13, 1
        %s228 = sand.u32 %s53, 1
        %s229 = scalar_lea.sflag [#allocation4], %s228
        %s230 = sand.u32 %s53, 1
        %s231 = smul.addr %s230, 8
        %s232 = scalar_lea.vmem [#allocation3], %s231
        // Predicated region
        $region33: #{tpu_custom_call.1} parent=31 // pred_check
          %p233 = pneg %p66
        $region34: #{tpu_custom_call.1} parent=31 // pred_check_branch
          %235 = sbr.rel (%p233) target = $region36
        $region35: #{tpu_custom_call.1} parent=31 // pred_region
          %236 = dma.done %s229, 128
        $region36: #{tpu_custom_call.1} parent=31 // pred_fallthru
          _
        // Predicated region
        $region37: #{tpu_custom_call.1} parent=31 // pred_check
          %p237 = pneg %p121
        $region38: #{tpu_custom_call.1} parent=31 // pred_check_branch
          %239 = sbr.rel (%p237) target = $region40
        $region39: #{tpu_custom_call.1} parent=31 // pred_region
          %240 = dma.done [#allocation5], 16
        $region40: #{tpu_custom_call.1} parent=31 // pred_fallthru
          _
        %241 = sfence
        %s242 = sand.u32 %s53, 1
        %s243 = scalar_lea.sflag [#allocation4], %s242
        %s244 = sand.u32 %s53, 1
        %s245 = smul.addr %s244, 8
        %s246 = scalar_lea.vmem [#allocation3], %s245
        %p247 = pneg %p66
        %p248 = pneg %p63
        %s249 = sadd.s32 %s23, %s25
        %p250 = scmp.lt.s32.totalorder %s249, 0
        %s251 = scalar_select %p250, %s249, 0
        %s252 = smul.u32 2, %s251
        %p253 = scmp.lt.s32.totalorder %s24, 1
        %s254 = scalar_select %p253, %s24, 1
        %p255 = scmp.lt.s32.totalorder %s252, 1
        %s256 = scalar_select %p255, %s252, 1
        %s257 = smul.addr %s254, 2
        %s258 = sadd.s32 %s256, %s257
        %s259 = scalar_lea.vmem %s1, %s258
        %p260 = pneg %p100
        %p261 = pneg %p97
        %p262 = pneg %p121
        %p263 = pneg %p118
        %p264 = pneg %p149
        %p265 = pneg %p146
        %p266 = scmp.lt.s32.totalorder %s23, 0
        %s267 = scalar_select %p266, %s23, 0
        %p268 = scmp.lt.s32.totalorder %s24, 1
        %s269 = scalar_select %p268, %s24, 1
        %s270 = smul.addr %s267, 2
        %s271 = sadd.s32 %s269, %s270
        %s272 = scalar_lea.vmem %s3, %s271
        %s273 = sadd.s32 %s23, %s25
        %p274 = scmp.lt.s32.totalorder %s273, 0
        %s275 = scalar_select %p274, %s273, 0
        %s276 = smul.u32 2, %s275
        %s277 = sadd.s32 %s23, %s25
        %p278 = scmp.lt.s32.totalorder %s277, 0
        %s279 = scalar_select %p278, %s277, 0
        %s280 = smul.u32 2, %s279
        %p281 = scmp.lt.s32.totalorder %s24, 1
        %s282 = scalar_select %p281, %s24, 1
        %p283 = scmp.lt.s32.totalorder %s280, 1
        %s284 = scalar_select %p283, %s280, 1
        %s285 = smul.addr %s282, 2
        %s286 = sadd.s32 %s284, %s285
        %s287 = scalar_lea.vmem %s1, %s286
        %s288 = sadd.s32 %s23, %s25
        %p289 = scmp.lt.s32.totalorder %s288, 0
        %s290 = scalar_select %p289, %s288, 0
        %s291 = smul.u32 2, %s290
        %p292 = scmp.lt.s32.totalorder %s23, 0
        %s293 = scalar_select %p292, %s23, 0
        %p294 = scmp.lt.s32.totalorder %s24, 1
        %s295 = scalar_select %p294, %s24, 1
        %s296 = smul.addr %s293, 2
        %s297 = sadd.s32 %s295, %s296
        %s298 = scalar_lea.vmem %s3, %s297
        %p299 = scmp.eq.s32.totalorder %s25, 0
        // Predicated region
        $region41: #{tpu_custom_call.1} parent=31 // pred_check
          %p300 = pneg %p299
        $region42: #{tpu_custom_call.1} parent=31 // pred_check_branch
          %302 = sbr.rel (%p300) target = $region44
        $region43: #{tpu_custom_call.1} parent=31 // pred_region
          %v303 = vlaneseq
          %vm304 = vcmp.ge.s32.totalorder %v303, 0
          %vm305 = vcmp.lt.s32.totalorder %v303, 256
          %vm306 = vmand %vm304, %vm305
          %307 = vst.msk [vmem:[#allocation2] sm:$0x3] %vm306, 0.0
        $region44: #{tpu_custom_call.1} parent=31 // pred_fallthru
          _
        %v308 = vld [vmem:[%s232] sm:$0xff]
        %v309 = vld [vmem:[%s287] sm:$0x3]
        %v310 = vunpack.c.0.s8 %v309
        %v312 = vcombine.high %v308, %v308
        %vm314 = vcmask 1043456
        %v315 = vsel %vm314, %v308, -inf
        %v316 = vrot.slane %v315, 4
        %v317 = vmax.f32 %v315, %v316
        %v318 = vrot.slane %v317, 2
        %v319 = vmax.f32 %v317, %v318
        %v320 = vrot.slane %v319, 1
        %v321 = vmax.f32 %v319, %v320
        %v322 = vsel %vm314, %v312, -inf
        %v323 = vrot.slane %v322, 4
        %v324 = vmax.f32 %v322, %v323
        %v325 = vrot.slane %v324, 2
        %v326 = vmax.f32 %v324, %v325
        %v327 = vrot.slane %v326, 1
        %v328 = vmax.f32 %v326, %v327
        %v331 = vcombine.low %v321, %v328
        %v333 = vsub.f32 %v308, %v331
        %v334 = vmul.f32 %v333, 1.442695
        %v335 = vpow.pop %v334
        %v337 = vcombine.high %v335, %v335
        %v339 = vsel %vm314, %v335, 0.0
        %v340 = vrot.slane %v339, 4
        %v341 = vadd.f32 %v339, %v340
        %v342 = vrot.slane %v341, 2
        %v343 = vadd.f32 %v341, %v342
        %v344 = vrot.slane %v343, 1
        %v345 = vadd.f32 %v343, %v344
        %v346 = vsel %vm314, %v337, 0.0
        %v347 = vrot.slane %v346, 4
        %v348 = vadd.f32 %v346, %v347
        %v349 = vrot.slane %v348, 2
        %v350 = vadd.f32 %v348, %v349
        %v351 = vrot.slane %v350, 1
        %v352 = vadd.f32 %v350, %v351
        %v353 = vlog2.pop %v345
        %v354 = vmul.f32 %v353, 0.6931472
        %v355 = vlog2.pop %v352
        %v356 = vmul.f32 %v355, 0.6931472
        %v357 = vlaneseq
        %v358 = vshrl.u32 %v357, 7
        %v359 = vlaneseq
        %v360 = vshrl.u32 %v359, 7
        %v361 = vsub.s32 0, %v360
        %v362 = vrot.slane %v310, %v361
        %v363 = vlaneseq
        %v364 = vshrl.u32 %v363, 7
        %v365 = vsub.s32 4, %v364
        %v366 = vrot.slane %v310, %v365
        %v367 = vlaneseq
        %v368 = vshrl.u32 %v367, 7
        %v369 = vsub.s32 0, %v368
        %v370 = vrot.slane %v362, %v369
        %v371 = vlaneseq
        %v372 = vshrl.u32 %v371, 7
        %v373 = vsub.s32 0, %v372
        %v374 = vrot.slane %v366, %v373
        %vm375 = vcmp.eq.s32.totalorder %v358, %v370
        %vm376 = vcmp.eq.s32.totalorder %v358, %v374
        %v378 = vcombine.high %v333, %v333
        %v380 = vsel %vm375, %v333, 0.0
        %v381 = vsel %vm376, %v378, 0.0
        %v382 = vsel %vm314, %v380, 0.0
        %v383 = vrot.slane %v382, 4
        %v384 = vadd.f32 %v382, %v383
        %v385 = vrot.slane %v384, 2
        %v386 = vadd.f32 %v384, %v385
        %v387 = vrot.slane %v386, 1
        %v388 = vadd.f32 %v386, %v387
        %v389 = vsel %vm314, %v381, 0.0
        %v390 = vrot.slane %v389, 4
        %v391 = vadd.f32 %v389, %v390
        %v392 = vrot.slane %v391, 2
        %v393 = vadd.f32 %v391, %v392
        %v394 = vrot.slane %v393, 1
        %v395 = vadd.f32 %v393, %v394
        %v396 = vsub.f32 %v388, %v354
        %v397 = vsub.f32 %v395, %v356
        %s398 = sld [smem:[#allocation6]]
        %v399 = vstv %s398
        %vm400 = vcmp.eq.s32.totalorder %v310, 1
        %s401 = sld [smem:[#allocation6 + $0x1]]
        %v402 = vstv %s401
        %v403 = vsel %vm400, %v402, %v399
        %vm404 = vcmp.eq.s32.totalorder %v310, 2
        %s405 = sld [smem:[#allocation6 + $0x2]]
        %v406 = vstv %s405
        %v407 = vsel %vm404, %v406, %v403
        %vm408 = vcmp.eq.s32.totalorder %v310, 3
        %s409 = sld [smem:[#allocation6 + $0x3]]
        %v410 = vstv %s409
        %v411 = vsel %vm408, %v410, %v407
        %v413 = vlaneseq
        %v414 = vshrl.u32 %v413, 7
        %v415 = vsub.s32 0, %v414
        %v416 = vrot.slane %v411, %v415
        %v417 = vlaneseq
        %v418 = vshrl.u32 %v417, 7
        %v419 = vsub.s32 4, %v418
        %v420 = vrot.slane %v411, %v419
        %v423 = vmul.f32 %v396, %v416
        %v424 = vmul.f32 %v397, %v420
        %v425 = vmul.f32 %v396, 1.442695
        %v426 = vpow.pop %v425
        %v427 = vmul.f32 %v397, 1.442695
        %v428 = vpow.pop %v427
        %v429 = vsub.f32 1.0, %v426
        %v430 = vsub.f32 1.0, %v428
        %v431 = vmax.f32 %v429, 0.0
        %v432 = vmax.f32 %v430, 0.0
        %v433 = vmul.f32 %v431, %v431
        %v434 = vmul.f32 %v432, %v432
        %v435 = vsub.f32 0.0, %v433
        %v436 = vsub.f32 0.0, %v434
        %v437 = vmul.f32 %v435, %v423
        %v438 = vmul.f32 %v436, %v424
        %v439 = vld [vmem:[#allocation2] sm:$0x3]
        %v442 = vcombine.low %v437, %v438
        %v444 = vunpack.c.l.s4 1966171168
        %v445 = vunpack.c.0.s8 %v444
        %v446 = vlaneseq
        %v447 = vshrl.u32 %v446, 7
        %v448 = vsub.s32 %v445, %v447
        %v449 = vrot.slane %v442, %v448
        %v451 = vunpack.c.l.s4 1966171168
        %v452 = vunpack.c.0.s8 %v451
        %v453 = vlaneseq
        %v454 = vshrl.u32 %v453, 7
        %v455 = vsub.s32 %v452, %v454
        %v456 = vrot.slane %v449, %v455
        %v458 = vadd.f32 %v439, %v456
        %v459 = vlaneseq
        %vm460 = vcmp.ge.s32.totalorder %v459, 0
        %vm461 = vcmp.lt.s32.totalorder %v459, 256
        %vm462 = vmand %vm460, %vm461
        %463 = vst.msk [vmem:[#allocation2] sm:$0x3] %vm462, %v458
        // Predicated region
        $region45: #{tpu_custom_call.1} parent=31 // pred_check
          %p464 = pneg %p299
        $region46: #{tpu_custom_call.1} parent=31 // pred_check_branch
          %466 = sbr.rel (%p464) target = $region48
        $region47: #{tpu_custom_call.1} parent=31 // pred_region
          %v467 = vld [vmem:[#allocation2] sm:$0x3]
          %v469 = vlaneseq
          %v470 = vshrl.u32 %v469, 7
          %v471 = vsub.s32 0, %v470
          %v472 = vrot.slane %v467, %v471
          %v473 = vlaneseq
          %v474 = vshrl.u32 %v473, 7
          %v475 = vsub.s32 1, %v474
          %v476 = vrot.slane %v467, %v475
          %vm479 = vcmask 1040384
          %v480 = vsel %vm479, %v472, 0.0
          %v481 = vsel %vm479, %v476, 0.0
          %v482 = vadd.f32 %v480, %v481
          %483 = vadd.xlane.f32.xlu0 %v482
          %v484 = vpop.xlane.xlu0 %483
          %v485 = vrot.slane %v484, 4
          %v486 = vadd.f32 %v484, %v485
          %v487 = vrot.slane %v486, 2
          %v488 = vadd.f32 %v486, %v487
          %v489 = vrot.slane %v488, 1
          %v490 = vadd.f32 %v488, %v489
          %s491 = vtos %v490
          %v492 = vstv %s491
          %vm493 = vcmask 0
          %494 = vst.msk [vmem:[%s298] sm:$0x1] %vm493, %v492
        $region48: #{tpu_custom_call.1} parent=31 // pred_fallthru
          _
        %p495 = scmp.lt.s32.totalorder %s23, 0
        %s496 = scalar_select %p495, %s23, 0
        %p497 = scmp.lt.s32.totalorder %s24, 1
        %s498 = scalar_select %p497, %s24, 1
        %s499 = smul.addr %s496, 2
        %s500 = sadd.s32 %s498, %s499
        %s501 = scalar_lea.vmem %s3, %s500
        // Predicated region
        $region49: #{tpu_custom_call.1} parent=31 // pred_check
          %p502 = pneg %p146
        $region50: #{tpu_custom_call.1} parent=31 // pred_check_branch
          %504 = sbr.rel (%p502) target = $region52
        $region51: #{tpu_custom_call.1} parent=31 // pred_region
          _
        $region52: #{tpu_custom_call.1} parent=31 // pred_fallthru
          _
      $region32: #{tpu_custom_call.1} parent=5 // pred_fallthru
        _
      %p505 = scmp.le.s32.totalorder 2, %s13
      // Predicated region
      $region53: #{tpu_custom_call.1} parent=5 // pred_check
        %p506 = pneg %p505
      $region54: #{tpu_custom_call.1} parent=5 // pred_check_branch
        %508 = sbr.rel (%p506) target = $region56
      $region55: #{tpu_custom_call.1} parent=5 // pred_region
        %s509 = ssub.s32 %s13, 2
        // Predicated region
        $region57: #{tpu_custom_call.1} parent=55 // pred_check
          %p510 = pneg %p152
        $region58: #{tpu_custom_call.1} parent=55 // pred_check_branch
          %512 = sbr.rel (%p510) target = $region60
        $region59: #{tpu_custom_call.1} parent=55 // pred_region
          %p513 = scmp.lt.s32.totalorder %s26, 0
          %s514 = scalar_select %p513, %s26, 0
          %p515 = scmp.lt.s32.totalorder %s27, 1
          %s516 = scalar_select %p515, %s27, 1
          %s517 = smul.addr %s514, 2
          %s518 = sadd.s32 %s516, %s517
          %s519 = scalar_lea.vmem %s3, %s518
        $region60: #{tpu_custom_call.1} parent=55 // pred_fallthru
          _
      $region56: #{tpu_custom_call.1} parent=5 // pred_fallthru
        _
    $region6: #{tpu_custom_call.1} parent=1 // loop_footer
      %s17 = sadd.s32 1, %s13
    $region7: #{tpu_custom_call.1} parent=1 // loop_footer_branch
      %12 = sbr.rel target = $region3
    $region8: #{tpu_custom_call.1} parent=1 // loop_exit
      _
    %520 = vsyncpa [#allocation4], 1
    %s521 = scalar_lea.sflag [#allocation4], 1
    %522 = vsyncpa %s521, 1
    %523 = vsyncpa [#allocation5], 1
    %s524 = scalar_lea.sflag [#allocation5], 1
    %525 = vsyncpa %s524, 1

</llo_original>
